<compile_context>
chip_gen: v6e
topology: v6e:2x2x1
jax: 0.10.0
libtpu: 0.0.40
codegen_flags: <defaults>
</compile_context>

<pallas_src>
import functools

import jax
import jax.numpy as jnp
from jax.experimental import pallas as pl
from jax.experimental.pallas import tpu as pltpu

LANE = 128


def _round_up(n, m):
    return ((n + m - 1) // m) * m


def _critic_mlp_kernel(x_ref, w1_ref, b1_ref, w2_ref, b2_ref, w3_ref, b3_ref,
                       o_ref, *, reduce_head: bool):
    # fc1 + ReLU: bf16 MXU matmul, f32 accumulate, f32 bias/ReLU epilogue.
    x = x_ref[...].astype(w1_ref.dtype)      # cast in-kernel: x is read from HBM once
    h1 = jnp.dot(x, w1_ref[...], preferred_element_type=jnp.float32)
    h1 = jnp.maximum(h1 + b1_ref[...], 0.0)
    # fc2 + ReLU
    h2 = jnp.dot(h1.astype(w2_ref.dtype), w2_ref[...],
                 preferred_element_type=jnp.float32)
    h2 = jnp.maximum(h2 + b2_ref[...], 0.0)
    if reduce_head:
        # Scalar value head, lane-dense: (8, H) @ (H, TB) on the otherwise-idle
        # MXU (rows 1..7 of w3 are zero), collapse the sublane axis, and store a
        # full (1, TB) row instead of a (TB, 1) masked-store column.
        h2t = h2.T.astype(w3_ref.dtype)                                  # (H, TB)
        out = jnp.dot(w3_ref[...], h2t, preferred_element_type=jnp.float32)
        out = jnp.sum(out, axis=0, keepdims=True)                        # (1, TB)
    else:
        out = jnp.dot(h2.astype(w3_ref.dtype), w3_ref[...],
                      preferred_element_type=jnp.float32)
    o_ref[...] = (out + b3_ref[...]).astype(o_ref.dtype)


def prepare_critic_params(params, compute_dtype=jnp.bfloat16):
    """One-time weight padding/casting, hoisted out of the per-call forward path.
    Hidden dims are zero-padded to the 128-lane boundary (exact: padded columns
    get zero weight + zero bias, stay zero through ReLU, contribute nothing).
    Returns (prepared_dict, n_out)."""
    w1, b1 = params["w1"], params["b1"]
    w2, b2 = params["w2"], params["b2"]
    w3, b3 = params["w3"], params["b3"]
    f_in, hidden = w1.shape
    n_out = w3.shape[1]
    h_p = _round_up(hidden, LANE)
    f32 = jnp.float32
    cd = compute_dtype
    prep = {
        "w1": jnp.zeros((f_in, h_p), cd).at[:, :hidden].set(w1.astype(cd)),
        "b1": jnp.zeros((1, h_p), f32).at[:, :hidden].set(b1.astype(f32)),
        "w2": jnp.zeros((h_p, h_p), cd).at[:hidden, :hidden].set(w2.astype(cd)),
        "b2": jnp.zeros((1, h_p), f32).at[:, :hidden].set(b2.astype(f32)),
    }
    if n_out == 1:
        # Value head: row 0 holds w3^T, rows 1..7 are zero -> native 8-sublane
        # MXU operand whose sublane-sum equals the scalar head.
        prep["w3"] = jnp.zeros((8, h_p), cd).at[0, :hidden].set(w3[:, 0].astype(cd))
        prep["b3"] = b3.astype(f32).reshape(1, 1)
    else:
        n_out_p = _round_up(n_out, LANE)
        prep["w3"] = jnp.zeros((h_p, n_out_p), cd).at[:hidden, :n_out].set(w3.astype(cd))
        prep["b3"] = jnp.zeros((1, n_out_p), f32).at[:, :n_out].set(b3.astype(f32))
    return prep, n_out


@functools.partial(jax.jit, static_argnames=("n_out", "block_b"))
def critic_forward(x, prep, *, n_out, block_b=512):
    """x: (B, f_in) float32; prep: output of prepare_critic_params."""
    w1, b1 = prep["w1"], prep["b1"]
    w2, b2 = prep["w2"], prep["b2"]
    w3, b3 = prep["w3"], prep["b3"]
    B, f_in = x.shape
    assert w1.shape[0] == f_in
    h_p = w1.shape[1]
    reduce_head = (n_out == 1)
    n_out_p = 1 if reduce_head else w3.shape[1]
    f32 = jnp.float32

    # --- batch tiling --------------------------------------------------------
    if B <= block_b:
        tb = _round_up(B, 16)            # single tile: grid = (1,)
    else:
        tb = _round_up(block_b, 128)     # lane-dense head output needs tb % 128 == 0
        n_tiles = pl.cdiv(B, tb)
        if n_tiles % 2 == 1:
            # v7x megacore: prefer an even tile count so both TensorCores are fed.
            tb_alt = _round_up(pl.cdiv(B, n_tiles + 1), 128)
            if pl.cdiv(B, tb_alt) % 2 == 0:
                tb = tb_alt
    b_p = _round_up(B, tb)
    grid = b_p // tb

    # Pad only a ragged batch tail (no feature pad / no dtype cast in the wrapper).
    xk = x if b_p == B else jnp.pad(x, ((0, b_p - B), (0, 0)))

    if reduce_head:
        w3_spec = pl.BlockSpec((8, h_p), lambda i: (0, 0))
        b3_spec = pl.BlockSpec((1, 1), lambda i: (0, 0))
        out_spec = pl.BlockSpec((1, tb), lambda i: (0, i))       # lane-dense row
        out_shape = jax.ShapeDtypeStruct((1, b_p), f32)
    else:
        w3_spec = pl.BlockSpec((h_p, n_out_p), lambda i: (0, 0))
        b3_spec = pl.BlockSpec((1, n_out_p), lambda i: (0, 0))
        out_spec = pl.BlockSpec((tb, n_out_p), lambda i: (i, 0))
        out_shape = jax.ShapeDtypeStruct((b_p, n_out_p), f32)

    flops = 2 * b_p * (f_in * h_p + h_p * h_p + h_p * max(n_out_p, 8))
    bytes_accessed = int(xk.size) * xk.dtype.itemsize
    bytes_accessed += sum(int(a.size) * a.dtype.itemsize
                          for a in (w1, b1, w2, b2, w3, b3))
    bytes_accessed += b_p * n_out_p * 4

    out = pl.pallas_call(
        functools.partial(_critic_mlp_kernel, reduce_head=reduce_head),
        out_shape=out_shape,
        grid=(grid,),
        in_specs=[
            # batch-tiled activations (unpadded feature dim == full array dim)
            pl.BlockSpec((tb, f_in), lambda i: (i, 0)),
            # weights/biases: constant block index -> fetched once, VMEM-resident
            pl.BlockSpec((f_in, h_p), lambda i: (0, 0)),
            pl.BlockSpec((1, h_p), lambda i: (0, 0)),
            pl.BlockSpec((h_p, h_p), lambda i: (0, 0)),
            pl.BlockSpec((1, h_p), lambda i: (0, 0)),
            w3_spec,
            b3_spec,
        ],
        out_specs=out_spec,
        compiler_params=pltpu.CompilerParams(
            dimension_semantics=(("parallel",) if grid > 1 else ("arbitrary",))),
        cost_estimate=pl.CostEstimate(flops=int(flops), transcendentals=0,
                                      bytes_accessed=int(bytes_accessed)),
    )(xk, w1, b1, w2, b2, w3, b3)

    if reduce_head:
        return out[0, :B].reshape(B, 1)
    return out[:B, :n_out]


def init_critic_params(key, input_features, output_features, hidden_units):
    """Mirrors PyTorch nn.Linear default init (uniform +-1/sqrt(fan_in)).
    Weights stored as (in, out) = transpose of torch's (out, in)."""
    ks = jax.random.split(key, 6)

    def lin(kw, kb, fan_in, fan_out):
        bound = 1.0 / jnp.sqrt(fan_in)
        w = jax.random.uniform(kw, (fan_in, fan_out), jnp.float32, -bound, bound)
        b = jax.random.uniform(kb, (1, fan_out), jnp.float32, -bound, bound)
        return w, b

    w1, b1 = lin(ks[0], ks[1], input_features, hidden_units)
    w2, b2 = lin(ks[2], ks[3], hidden_units, hidden_units)
    w3, b3 = lin(ks[4], ks[5], hidden_units, output_features)
    return {"w1": w1, "b1": b1, "w2": w2, "b2": b2, "w3": w3, "b3": b3}


def _reference_forward(x, params, compute_dtype=jnp.bfloat16):
    """Pure-JAX reference mirroring the kernel numerics (bf16 matmul inputs,
    f32 accumulation, f32 bias/ReLU epilogue)."""
    cd = compute_dtype
    h1 = jnp.maximum(
        jnp.dot(x.astype(cd), params["w1"].astype(cd),
                preferred_element_type=jnp.float32) + params["b1"], 0.0)
    h2 = jnp.maximum(
        jnp.dot(h1.astype(cd), params["w2"].astype(cd),
                preferred_element_type=jnp.float32) + params["b2"], 0.0)
    return jnp.dot(h2.astype(cd), params["w3"].astype(cd),
                   preferred_element_type=jnp.float32) + params["b3"]


if __name__ == "__main__":
    # Critic shapes: state features -> scalar value.
    batch = 256
    input_features = 32
    hidden_units = 64
    output_features = 1

    key = jax.random.PRNGKey(0)
    k_x, k_p = jax.random.split(key)
    x = jax.random.normal(k_x, (batch, input_features), dtype=jnp.float32)
    params = init_critic_params(k_p, input_features, output_features, hidden_units)
    prep, n_out = prepare_critic_params(params)   # one-time padding/casting

    # Single-tile path (B <= block_b -> grid=(1,)).
    y = jax.block_until_ready(critic_forward(x, prep, n_out=n_out))
    y_ref = _reference_forward(x, params)
    assert y.shape == (batch, output_features)
    assert jnp.allclose(y, y_ref, atol=1e-3, rtol=1e-3), (
        float(jnp.max(jnp.abs(y - y_ref))))

    # Multi-tile path (grid > 1, even tile count, lane-dense output tiles).
    x_big = jax.random.normal(k_x, (1024, input_features), dtype=jnp.float32)
    y_big = jax.block_until_ready(critic_forward(x_big, prep, n_out=n_out, block_b=256))
    y_big_ref = _reference_forward(x_big, params)
    assert y_big.shape == (1024, output_features)
    assert jnp.allclose(y_big, y_big_ref, atol=1e-3, rtol=1e-3), (
        float(jnp.max(jnp.abs(y_big - y_big_ref))))

    # TODO(synk): fit()/Adam/MSELoss are training-side state, not part of forward.
    print("KERNEL_OK")
</pallas_src>

<mosaic_0001>
module attributes {stable_mosaic.version = 11 : i64} {
  func.func @_critic_mlp_kernel(%arg0: i32, %arg1: memref<256x32xf32, #tpu.memory_space<vmem>>, %arg2: memref<32x128xbf16, #tpu.memory_space<vmem>>, %arg3: memref<1x128xf32, #tpu.memory_space<vmem>>, %arg4: memref<128x128xbf16, #tpu.memory_space<vmem>>, %arg5: memref<1x128xf32, #tpu.memory_space<vmem>>, %arg6: memref<8x128xbf16, #tpu.memory_space<vmem>>, %arg7: memref<1x1xf32, #tpu.memory_space<vmem>>, %arg8: memref<1x256xf32, #tpu.memory_space<vmem>>) attributes {dimension_semantics = [#tpu.dimension_semantics<arbitrary>], iteration_bounds = array<i64: 1>, scalar_prefetch = 0 : i64, scratch_operands = 0 : i64, tpu.core_type = #tpu.core_type<tc>, window_params = [{transform_indices = @transform_0, window_bounds = array<i64: 256, 32>}, {pipeline_mode = #tpu.pipeline_mode<synchronous>, transform_indices = @transform_1, window_bounds = array<i64: 32, 128>}, {pipeline_mode = #tpu.pipeline_mode<synchronous>, transform_indices = @transform_2, window_bounds = array<i64: 1, 128>}, {pipeline_mode = #tpu.pipeline_mode<synchronous>, transform_indices = @transform_3, window_bounds = array<i64: 128, 128>}, {pipeline_mode = #tpu.pipeline_mode<synchronous>, transform_indices = @transform_4, window_bounds = array<i64: 1, 128>}, {pipeline_mode = #tpu.pipeline_mode<synchronous>, transform_indices = @transform_5, window_bounds = array<i64: 8, 128>}, {pipeline_mode = #tpu.pipeline_mode<synchronous>, transform_indices = @transform_6, window_bounds = array<i64: 1, 1>}, {transform_indices = @transform_7, window_bounds = array<i64: 1, 256>}]} {
    %c0 = arith.constant 0 : index
    %c0_0 = arith.constant 0 : index
    %0 = vector.load %arg1[%c0, %c0_0] : memref<256x32xf32, #tpu.memory_space<vmem>>, vector<256x32xf32>
    %1 = arith.truncf %0 : vector<256x32xf32> to vector<256x32xbf16>
    %c0_1 = arith.constant 0 : index
    %c0_2 = arith.constant 0 : index
    %2 = vector.load %arg2[%c0_1, %c0_2] : memref<32x128xbf16, #tpu.memory_space<vmem>>, vector<32x128xbf16>
    %cst = arith.constant dense<0.000000e+00> : vector<256x128xf32>
    %3 = tpu.matmul %1, %2, %cst {dimension_numbers = #tpu.dot_dimension_numbers<[1], [0], [0], [1], [0, 0, 1, 1], [], []>} : vector<256x32xbf16>, vector<32x128xbf16>, vector<256x128xf32> -> vector<256x128xf32>
    %c0_3 = arith.constant 0 : index
    %c0_4 = arith.constant 0 : index
    %4 = vector.load %arg3[%c0_3, %c0_4] : memref<1x128xf32, #tpu.memory_space<vmem>>, vector<1x128xf32>
    %5 = vector.broadcast %4 : vector<1x128xf32> to vector<256x128xf32>
    %6 = arith.addf %3, %5 : vector<256x128xf32>
    %cst_5 = arith.constant 0.000000e+00 : f32
    %7 = vector.broadcast %cst_5 : f32 to vector<256x128xf32>
    %8 = arith.maximumf %6, %7 : vector<256x128xf32>
    %9 = arith.truncf %8 : vector<256x128xf32> to vector<256x128xbf16>
    %c0_6 = arith.constant 0 : index
    %c0_7 = arith.constant 0 : index
    %10 = vector.load %arg4[%c0_6, %c0_7] : memref<128x128xbf16, #tpu.memory_space<vmem>>, vector<128x128xbf16>
    %cst_8 = arith.constant dense<0.000000e+00> : vector<256x128xf32>
    %11 = tpu.matmul %9, %10, %cst_8 {dimension_numbers = #tpu.dot_dimension_numbers<[1], [0], [0], [1], [0, 0, 1, 1], [], []>} : vector<256x128xbf16>, vector<128x128xbf16>, vector<256x128xf32> -> vector<256x128xf32>
    %c0_9 = arith.constant 0 : index
    %c0_10 = arith.constant 0 : index
    %12 = vector.load %arg5[%c0_9, %c0_10] : memref<1x128xf32, #tpu.memory_space<vmem>>, vector<1x128xf32>
    %13 = vector.broadcast %12 : vector<1x128xf32> to vector<256x128xf32>
    %14 = arith.addf %11, %13 : vector<256x128xf32>
    %cst_11 = arith.constant 0.000000e+00 : f32
    %15 = vector.broadcast %cst_11 : f32 to vector<256x128xf32>
    %16 = arith.maximumf %14, %15 : vector<256x128xf32>
    %17 = tpu.transpose %16, [1, 0] : vector<256x128xf32> -> vector<128x256xf32>
    %18 = arith.truncf %17 : vector<128x256xf32> to vector<128x256xbf16>
    %c0_12 = arith.constant 0 : index
    %c0_13 = arith.constant 0 : index
    %19 = vector.load %arg6[%c0_12, %c0_13] : memref<8x128xbf16, #tpu.memory_space<vmem>>, vector<8x128xbf16>
    %cst_14 = arith.constant dense<0.000000e+00> : vector<8x256xf32>
    %20 = tpu.matmul %19, %18, %cst_14 {dimension_numbers = #tpu.dot_dimension_numbers<[1], [0], [0], [1], [0, 0, 1, 1], [], []>} : vector<8x128xbf16>, vector<128x256xbf16>, vector<8x256xf32> -> vector<8x256xf32>
    %cst_15 = arith.constant dense<0.000000e+00> : vector<256xf32>
    %21 = vector.multi_reduction <add>, %20, %cst_15 [0] : vector<8x256xf32> to vector<256xf32>
    %22 = vector.shape_cast %21 : vector<256xf32> to vector<1x256xf32>
    %c0_16 = arith.constant 0 : index
    %c0_17 = arith.constant 0 : index
    %23 = vector.load %arg7[%c0_16, %c0_17] : memref<1x1xf32, #tpu.memory_space<vmem>>, vector<1x1xf32>
    %24 = vector.broadcast %23 : vector<1x1xf32> to vector<1x256xf32>
    %25 = arith.addf %22, %24 : vector<1x256xf32>
    %c0_18 = arith.constant 0 : index
    %c0_19 = arith.constant 0 : index
    %26 = vector.load %arg8[%c0_18, %c0_19] : memref<1x256xf32, #tpu.memory_space<vmem>>, vector<1x256xf32>
    tpu.vector_store %arg8[%c0_18, %c0_19], %25 {strides = array<i32>} : memref<1x256xf32, #tpu.memory_space<vmem>>, vector<1x256xf32>,
    return
  }
  func.func @transform_0(%arg0: i32) -> (i32, i32) {
    %c0_i32 = arith.constant 0 : i32
    %c0_i32_0 = arith.constant 0 : i32
    return %arg0, %c0_i32 : i32, i32
  }
  func.func @transform_1(%arg0: i32) -> (i32, i32) {
    %c0_i32 = arith.constant 0 : i32
    %c0_i32_0 = arith.constant 0 : i32
    %c0_i32_1 = arith.constant 0 : i32
    return %c0_i32, %c0_i32_0 : i32, i32
  }
  func.func @transform_2(%arg0: i32) -> (i32, i32) {
    %c0_i32 = arith.constant 0 : i32
    %c0_i32_0 = arith.constant 0 : i32
    %c0_i32_1 = arith.constant 0 : i32
    return %c0_i32, %c0_i32_0 : i32, i32
  }
  func.func @transform_3(%arg0: i32) -> (i32, i32) {
    %c0_i32 = arith.constant 0 : i32
    %c0_i32_0 = arith.constant 0 : i32
    %c0_i32_1 = arith.constant 0 : i32
    return %c0_i32, %c0_i32_0 : i32, i32
  }
  func.func @transform_4(%arg0: i32) -> (i32, i32) {
    %c0_i32 = arith.constant 0 : i32
    %c0_i32_0 = arith.constant 0 : i32
    %c0_i32_1 = arith.constant 0 : i32
    return %c0_i32, %c0_i32_0 : i32, i32
  }
  func.func @transform_5(%arg0: i32) -> (i32, i32) {
    %c0_i32 = arith.constant 0 : i32
    %c0_i32_0 = arith.constant 0 : i32
    %c0_i32_1 = arith.constant 0 : i32
    return %c0_i32, %c0_i32_0 : i32, i32
  }
  func.func @transform_6(%arg0: i32) -> (i32, i32) {
    %c0_i32 = arith.constant 0 : i32
    %c0_i32_0 = arith.constant 0 : i32
    %c0_i32_1 = arith.constant 0 : i32
    return %c0_i32, %c0_i32_0 : i32, i32
  }
  func.func @transform_7(%arg0: i32) -> (i32, i32) {
    %c0_i32 = arith.constant 0 : i32
    %c0_i32_0 = arith.constant 0 : i32
    return %c0_i32, %arg0 : i32, i32
  }
}

</mosaic_0001>

<llo_original>
// kernel: critic_forward.1
$region0: #{critic_forward.1}
  #allocation0 [shape = 'u32[]', space=smem, size = 0x4, offset = 0x4, fixed_abs, tag = 'smem constant byte address 0x4 - core index']
  #allocation1 [shape = 'u32[144,128]{1,0:T(1,128)}', space=vmem, size = 0x12000, scoped, tag = 'internal scratch']
  #allocation2 [shape = 'f32[1,1]{1,0:T(1,128)S(1)}', space=vmem, size = 0x200, scoped, tag = 'scoped memory for critic_forward.1']
  %s0 = inlined_call_operand.vmem [shape: f32[256,32], index: 0, kind: input, shape index: {}]
  %s1 = inlined_call_operand.vmem [shape: bf16[32,128], index: 1, kind: input, shape index: {}]
  %s2 = inlined_call_operand.vmem [shape: f32[1,128], index: 2, kind: input, shape index: {}]
  %s3 = inlined_call_operand.vmem [shape: bf16[128,128], index: 3, kind: input, shape index: {}]
  %s4 = inlined_call_operand.vmem [shape: f32[1,128], index: 4, kind: input, shape index: {}]
  %s5 = inlined_call_operand.vmem [shape: bf16[8,128], index: 5, kind: input, shape index: {}]
  %s6 = inlined_call_operand.<no memory space> [shape: f32[1,1], index: 6, kind: input, shape index: {}]
  %s7 = inlined_call_operand.hbm [shape: f32[1,256], index: 7, kind: output, shape index: {}]
  %s8 = sld [smem:[#allocation0]]
  $region38: #{critic_forward.1} parent=0
    _
  %s10 = ssub.s32 1, %s8
  %s11 = scalar_select 0, %s10, %s8
  %v12 = vstv %s6
  %13 = vst [vmem:[#allocation2] sm:$0x1] %v12
  $region1: #{critic_forward.1} parent=0
    #allocation3 [shape = 'u8[1024]{0}', space=vmem, size = 0x400, scoped, tag = 'output window, operand 0, single buffered']
    #allocation4 [shape = 's32[1]{0}', space=sflag, size = 0x4, scoped, tag = 'scoped memory for critic_forward.1']
    %14 = vsyncpa [#allocation4], 0
    // Predicated region
    $region2: #{critic_forward.1} parent=1 // pred_check
      _
    $region3: #{critic_forward.1} parent=1 // pred_check_branch
      %16 = sbr.rel (0) target = $region5
    $region4: #{critic_forward.1} parent=1 // pred_region
      _
    $region5: #{critic_forward.1} parent=1 // pred_fallthru
      _
    // Predicated region
    $region6: #{critic_forward.1} parent=1 // pred_check
      _
    $region7: #{critic_forward.1} parent=1 // pred_check_branch
      %18 = sbr.rel (0) target = $region9
    $region8: #{critic_forward.1} parent=1 // pred_region
      _
    $region9: #{critic_forward.1} parent=1 // pred_fallthru
      _
    // Predicated region
    $region10: #{critic_forward.1} parent=1 // pred_check
      _
    $region11: #{critic_forward.1} parent=1 // pred_check_branch
      %20 = sbr.rel (0) target = $region13
    $region12: #{critic_forward.1} parent=1 // pred_region
      _
    $region13: #{critic_forward.1} parent=1 // pred_fallthru
      _
    // Predicated region
    $region14: #{critic_forward.1} parent=1 // pred_check
      _
    $region15: #{critic_forward.1} parent=1 // pred_check_branch
      %22 = sbr.rel (0) target = $region17
    $region16: #{critic_forward.1} parent=1 // pred_region
      _
    $region17: #{critic_forward.1} parent=1 // pred_fallthru
      _
    // Predicated region
    $region18: #{critic_forward.1} parent=1 // pred_check
      _
    $region19: #{critic_forward.1} parent=1 // pred_check_branch
      %24 = sbr.rel (0) target = $region21
    $region20: #{critic_forward.1} parent=1 // pred_region
      _
    $region21: #{critic_forward.1} parent=1 // pred_fallthru
      _
    // Predicated region
    $region22: #{critic_forward.1} parent=1 // pred_check
      _
    $region23: #{critic_forward.1} parent=1 // pred_check_branch
      %26 = sbr.rel (0) target = $region25
    $region24: #{critic_forward.1} parent=1 // pred_region
      _
    $region25: #{critic_forward.1} parent=1 // pred_fallthru
      _
    // Predicated region
    $region26: #{critic_forward.1} parent=1 // pred_check
      _
    $region27: #{critic_forward.1} parent=1 // pred_check_branch
      %28 = sbr.rel (0) target = $region29
    $region28: #{critic_forward.1} parent=1 // pred_region
      _
    $region29: #{critic_forward.1} parent=1 // pred_fallthru
      _
    %v30 = vld [vmem:[%s0] sm:$0xff]
    %v31 = vld [vmem:[%s0 + $0x8] sm:$0xff]
    %v32 = vld [vmem:[%s0 + $0x10] sm:$0xff]
    %v33 = vld [vmem:[%s0 + $0x18] sm:$0xff]
    %v34 = vld [vmem:[%s0 + $0x20] sm:$0xff]
    %v35 = vld [vmem:[%s0 + $0x28] sm:$0xff]
    %v36 = vld [vmem:[%s0 + $0x30] sm:$0xff]
    %v37 = vld [vmem:[%s0 + $0x38] sm:$0xff]
    %v38 = vld [vmem:[%s0 + $0x40] sm:$0xff]
    %v39 = vld [vmem:[%s0 + $0x48] sm:$0xff]
    %v40 = vld [vmem:[%s0 + $0x50] sm:$0xff]
    %v41 = vld [vmem:[%s0 + $0x58] sm:$0xff]
    %v42 = vld [vmem:[%s0 + $0x60] sm:$0xff]
    %v43 = vld [vmem:[%s0 + $0x68] sm:$0xff]
    %v44 = vld [vmem:[%s0 + $0x70] sm:$0xff]
    %v45 = vld [vmem:[%s0 + $0x78] sm:$0xff]
    %v46 = vld [vmem:[%s0 + $0x80] sm:$0xff]
    %v47 = vld [vmem:[%s0 + $0x88] sm:$0xff]
    %v48 = vld [vmem:[%s0 + $0x90] sm:$0xff]
    %v49 = vld [vmem:[%s0 + $0x98] sm:$0xff]
    %v50 = vld [vmem:[%s0 + $0xa0] sm:$0xff]
    %v51 = vld [vmem:[%s0 + $0xa8] sm:$0xff]
    %v52 = vld [vmem:[%s0 + $0xb0] sm:$0xff]
    %v53 = vld [vmem:[%s0 + $0xb8] sm:$0xff]
    %v54 = vld [vmem:[%s0 + $0xc0] sm:$0xff]
    %v55 = vld [vmem:[%s0 + $0xc8] sm:$0xff]
    %v56 = vld [vmem:[%s0 + $0xd0] sm:$0xff]
    %v57 = vld [vmem:[%s0 + $0xd8] sm:$0xff]
    %v58 = vld [vmem:[%s0 + $0xe0] sm:$0xff]
    %v59 = vld [vmem:[%s0 + $0xe8] sm:$0xff]
    %v60 = vld [vmem:[%s0 + $0xf0] sm:$0xff]
    %v61 = vld [vmem:[%s0 + $0xf8] sm:$0xff]
    %v62 = vpack.c.bf16 %v31, %v30
    %v63 = vpack.c.bf16 %v33, %v32
    %v64 = vpack.c.bf16 %v35, %v34
    %v65 = vpack.c.bf16 %v37, %v36
    %v66 = vpack.c.bf16 %v39, %v38
    %v67 = vpack.c.bf16 %v41, %v40
    %v68 = vpack.c.bf16 %v43, %v42
    %v69 = vpack.c.bf16 %v45, %v44
    %v70 = vpack.c.bf16 %v47, %v46
    %v71 = vpack.c.bf16 %v49, %v48
    %v72 = vpack.c.bf16 %v51, %v50
    %v73 = vpack.c.bf16 %v53, %v52
    %v74 = vpack.c.bf16 %v55, %v54
    %v75 = vpack.c.bf16 %v57, %v56
    %v76 = vpack.c.bf16 %v59, %v58
    %v77 = vpack.c.bf16 %v61, %v60
    %v78 = vld [vmem:[%s1] sm:$0xf]
    %v79 = vld [vmem:[%s1 + $0x4] sm:$0xf]
    %v80 = vld [vmem:[%s1 + $0x8] sm:$0xf]
    %v81 = vld [vmem:[%s1 + $0xc] sm:$0xf]
    %v82 = vld [vmem:[%s2] sm:$0x1]
    %v84 = vlaneseq
    %v85 = vshrl.u32 %v84, 7
    %v86 = vsub.s32 0, %v85
    %v87 = vrot.slane %v82, %v86
    %v93 = vunpack.c.l.b16 %v78
    %v94 = vunpack.c.l.b16 %v79
    %v95 = vunpack.c.l.b16 %v80
    %v96 = vunpack.c.l.b16 %v81
    %v97 = vpack.c.b16 %v94, %v93
    %v98 = vpack.c.b16 %v96, %v95
    %vm101 = vcmask 261120
    %v103 = vsel %vm101, %v62, 0
    %v106 = vsel %vm101, %v63, 0
    %v109 = vsel %vm101, %v64, 0
    %v112 = vsel %vm101, %v65, 0
    %v115 = vsel %vm101, %v66, 0
    %v118 = vsel %vm101, %v67, 0
    %v121 = vsel %vm101, %v68, 0
    %v124 = vsel %vm101, %v69, 0
    %v127 = vsel %vm101, %v70, 0
    %v130 = vsel %vm101, %v71, 0
    %v133 = vsel %vm101, %v72, 0
    %v136 = vsel %vm101, %v73, 0
    %v139 = vsel %vm101, %v74, 0
    %v142 = vsel %vm101, %v75, 0
    %v145 = vsel %vm101, %v76, 0
    %v148 = vsel %vm101, %v77, 0
    %150 = vmatprep.subr.bf16.mxu0 0
    %151 = vmatpush1.bf16.msra.mxu0 0
    %152 = vmatprep.subr.bf16.mxu0 0
    %153 = vmatpush1.bf16.msra.mxu0 0
    %154 = vmatprep.subr.bf16.mxu0 0
    %155 = vmatpush1.bf16.msra.mxu0 0
    %156 = vmatprep.subr.bf16.mxu0 0
    %157 = vmatpush1.bf16.msra.mxu0 0
    %158 = vmatprep.subr.bf16.mxu0 0
    %159 = vmatpush1.bf16.msra.mxu0 0
    %160 = vmatprep.subr.bf16.mxu0 0
    %161 = vmatpush1.bf16.msra.mxu0 0
    %162 = vmatprep.subr.bf16.mxu0 0
    %163 = vmatpush1.bf16.msra.mxu0 %v98
    %164 = vmatprep.subr.bf16.mxu0 0
    %165 = vmatpush1.bf16.msra.mxu0 %v97
    %166 = vmatprep.subr.bf16.mxu0 0
    %167 = vmatpush2.bf16.msra.mxu0 0
    %168 = vmatprep.subr.bf16.mxu0 0
    %169 = vmatpush2.bf16.msra.mxu0 0
    %170 = vmatprep.subr.bf16.mxu0 0
    %171 = vmatpush2.bf16.msra.mxu0 0
    %172 = vmatprep.subr.bf16.mxu0 0
    %173 = vmatpush2.bf16.msra.mxu0 0
    %174 = vmatprep.subr.bf16.mxu0 0
    %175 = vmatpush2.bf16.msra.mxu0 0
    %176 = vmatprep.subr.bf16.mxu0 0
    %177 = vmatpush2.bf16.msra.mxu0 0
    %178 = vmatprep.subr.bf16.mxu0 0
    %179 = vmatpush2.bf16.msra.mxu0 0
    %180 = vmatprep.subr.bf16.mxu0 0
    %181 = vmatpush2.bf16.msra.mxu0 0
    %182 = vmatprep.mubr.bf16.mxu0 0
    %183 = vmatmul.mubr.bf16.gmra.mxu0 %v103
    %v184 = vpop.f32.mrf.mxu0
    %v185 = vadd.f32 %v87, %v184
    %v186 = vpop.f32.mrf.mxu0
    %v187 = vpop.f32.mrf.mxu0
    %v188 = vadd.f32 %v87, %v187
    %v189 = vpop.f32.mrf.mxu0
    %190 = vmatprep.mubr.bf16.mxu0 0
    %191 = vmatmul.mubr.bf16.gmra.mxu0 %v106
    %v192 = vpop.f32.mrf.mxu0
    %v193 = vadd.f32 %v87, %v192
    %v194 = vpop.f32.mrf.mxu0
    %v195 = vpop.f32.mrf.mxu0
    %v196 = vadd.f32 %v87, %v195
    %v197 = vpop.f32.mrf.mxu0
    %198 = vmatprep.mubr.bf16.mxu0 0
    %199 = vmatmul.mubr.bf16.gmra.mxu0 %v109
    %v200 = vpop.f32.mrf.mxu0
    %v201 = vadd.f32 %v87, %v200
    %v202 = vpop.f32.mrf.mxu0
    %v203 = vpop.f32.mrf.mxu0
    %v204 = vadd.f32 %v87, %v203
    %v205 = vpop.f32.mrf.mxu0
    %206 = vmatprep.mubr.bf16.mxu0 0
    %207 = vmatmul.mubr.bf16.gmra.mxu0 %v112
    %v208 = vpop.f32.mrf.mxu0
    %v209 = vadd.f32 %v87, %v208
    %v210 = vpop.f32.mrf.mxu0
    %v211 = vpop.f32.mrf.mxu0
    %v212 = vadd.f32 %v87, %v211
    %v213 = vpop.f32.mrf.mxu0
    %214 = vmatprep.mubr.bf16.mxu0 0
    %215 = vmatmul.mubr.bf16.gmra.mxu0 %v115
    %v216 = vpop.f32.mrf.mxu0
    %v217 = vadd.f32 %v87, %v216
    %v218 = vpop.f32.mrf.mxu0
    %v219 = vpop.f32.mrf.mxu0
    %v220 = vadd.f32 %v87, %v219
    %v221 = vpop.f32.mrf.mxu0
    %222 = vmatprep.mubr.bf16.mxu0 0
    %223 = vmatmul.mubr.bf16.gmra.mxu0 %v118
    %v224 = vpop.f32.mrf.mxu0
    %v225 = vadd.f32 %v87, %v224
    %v226 = vpop.f32.mrf.mxu0
    %v227 = vpop.f32.mrf.mxu0
    %v228 = vadd.f32 %v87, %v227
    %v229 = vpop.f32.mrf.mxu0
    %230 = vmatprep.mubr.bf16.mxu0 0
    %231 = vmatmul.mubr.bf16.gmra.mxu0 %v121
    %v232 = vpop.f32.mrf.mxu0
    %v233 = vadd.f32 %v87, %v232
    %v234 = vpop.f32.mrf.mxu0
    %v235 = vpop.f32.mrf.mxu0
    %v236 = vadd.f32 %v87, %v235
    %v237 = vpop.f32.mrf.mxu0
    %238 = vmatprep.mubr.bf16.mxu0 0
    %239 = vmatmul.mubr.bf16.gmra.mxu0 %v124
    %v240 = vpop.f32.mrf.mxu0
    %v241 = vadd.f32 %v87, %v240
    %v242 = vpop.f32.mrf.mxu0
    %v243 = vpop.f32.mrf.mxu0
    %v244 = vadd.f32 %v87, %v243
    %v245 = vpop.f32.mrf.mxu0
    %246 = vmatprep.mubr.bf16.mxu0 0
    %247 = vmatmul.mubr.bf16.gmra.mxu0 %v127
    %v248 = vpop.f32.mrf.mxu0
    %v249 = vadd.f32 %v87, %v248
    %v250 = vpop.f32.mrf.mxu0
    %v251 = vpop.f32.mrf.mxu0
    %v252 = vadd.f32 %v87, %v251
    %v253 = vpop.f32.mrf.mxu0
    %254 = vmatprep.mubr.bf16.mxu0 0
    %255 = vmatmul.mubr.bf16.gmra.mxu0 %v130
    %v256 = vpop.f32.mrf.mxu0
    %v257 = vadd.f32 %v87, %v256
    %v258 = vpop.f32.mrf.mxu0
    %v259 = vpop.f32.mrf.mxu0
    %v260 = vadd.f32 %v87, %v259
    %v261 = vpop.f32.mrf.mxu0
    %262 = vmatprep.mubr.bf16.mxu0 0
    %263 = vmatmul.mubr.bf16.gmra.mxu0 %v133
    %v264 = vpop.f32.mrf.mxu0
    %v265 = vadd.f32 %v87, %v264
    %v266 = vpop.f32.mrf.mxu0
    %v267 = vpop.f32.mrf.mxu0
    %v268 = vadd.f32 %v87, %v267
    %v269 = vpop.f32.mrf.mxu0
    %270 = vmatprep.mubr.bf16.mxu0 0
    %271 = vmatmul.mubr.bf16.gmra.mxu0 %v136
    %v272 = vpop.f32.mrf.mxu0
    %v273 = vadd.f32 %v87, %v272
    %v274 = vpop.f32.mrf.mxu0
    %v275 = vpop.f32.mrf.mxu0
    %v276 = vadd.f32 %v87, %v275
    %v277 = vpop.f32.mrf.mxu0
    %278 = vmatprep.mubr.bf16.mxu0 0
    %279 = vmatmul.mubr.bf16.gmra.mxu0 %v139
    %v280 = vpop.f32.mrf.mxu0
    %v281 = vadd.f32 %v87, %v280
    %v282 = vpop.f32.mrf.mxu0
    %v283 = vpop.f32.mrf.mxu0
    %v284 = vadd.f32 %v87, %v283
    %v285 = vpop.f32.mrf.mxu0
    %286 = vmatprep.mubr.bf16.mxu0 0
    %287 = vmatmul.mubr.bf16.gmra.mxu0 %v142
    %v288 = vpop.f32.mrf.mxu0
    %v289 = vadd.f32 %v87, %v288
    %v290 = vpop.f32.mrf.mxu0
    %v291 = vpop.f32.mrf.mxu0
    %v292 = vadd.f32 %v87, %v291
    %v293 = vpop.f32.mrf.mxu0
    %294 = vmatprep.mubr.bf16.mxu0 0
    %295 = vmatmul.mubr.bf16.gmra.mxu0 %v145
    %v296 = vpop.f32.mrf.mxu0
    %v297 = vadd.f32 %v87, %v296
    %v298 = vpop.f32.mrf.mxu0
    %v299 = vpop.f32.mrf.mxu0
    %v300 = vadd.f32 %v87, %v299
    %v301 = vpop.f32.mrf.mxu0
    %302 = vmatprep.mubr.bf16.mxu0 0
    %303 = vmatmul.mubr.bf16.gmra.mxu0 %v148
    %v304 = vpop.f32.mrf.mxu0
    %v305 = vadd.f32 %v87, %v304
    %v306 = vpop.f32.mrf.mxu0
    %v307 = vpop.f32.mrf.mxu0
    %v308 = vadd.f32 %v87, %v307
    %v309 = vpop.f32.mrf.mxu0
    %310 = vdwg.mxu0
    %v311 = vmax.f32 %v185, 0.0
    %v312 = vmax.f32 %v188, 0.0
    %v313 = vmax.f32 %v193, 0.0
    %v314 = vmax.f32 %v196, 0.0
    %v315 = vmax.f32 %v201, 0.0
    %v316 = vmax.f32 %v204, 0.0
    %v317 = vmax.f32 %v209, 0.0
    %v318 = vmax.f32 %v212, 0.0
    %v319 = vmax.f32 %v217, 0.0
    %v320 = vmax.f32 %v220, 0.0
    %v321 = vmax.f32 %v225, 0.0
    %v322 = vmax.f32 %v228, 0.0
    %v323 = vmax.f32 %v233, 0.0
    %v324 = vmax.f32 %v236, 0.0
    %v325 = vmax.f32 %v241, 0.0
    %v326 = vmax.f32 %v244, 0.0
    %v327 = vmax.f32 %v249, 0.0
    %v328 = vmax.f32 %v252, 0.0
    %v329 = vmax.f32 %v257, 0.0
    %v330 = vmax.f32 %v260, 0.0
    %v331 = vmax.f32 %v265, 0.0
    %v332 = vmax.f32 %v268, 0.0
    %v333 = vmax.f32 %v273, 0.0
    %v334 = vmax.f32 %v276, 0.0
    %v335 = vmax.f32 %v281, 0.0
    %v336 = vmax.f32 %v284, 0.0
    %v337 = vmax.f32 %v289, 0.0
    %v338 = vmax.f32 %v292, 0.0
    %v339 = vmax.f32 %v297, 0.0
    %v340 = vmax.f32 %v300, 0.0
    %v341 = vmax.f32 %v305, 0.0
    %v342 = vmax.f32 %v308, 0.0
    %v343 = vpack.c.bf16 %v312, %v311
    %v344 = vpack.c.bf16 %v314, %v313
    %v345 = vpack.c.bf16 %v316, %v315
    %v346 = vpack.c.bf16 %v318, %v317
    %v347 = vpack.c.bf16 %v320, %v319
    %v348 = vpack.c.bf16 %v322, %v321
    %v349 = vpack.c.bf16 %v324, %v323
    %v350 = vpack.c.bf16 %v326, %v325
    %v351 = vpack.c.bf16 %v328, %v327
    %v352 = vpack.c.bf16 %v330, %v329
    %v353 = vpack.c.bf16 %v332, %v331
    %v354 = vpack.c.bf16 %v334, %v333
    %v355 = vpack.c.bf16 %v336, %v335
    %v356 = vpack.c.bf16 %v338, %v337
    %v357 = vpack.c.bf16 %v340, %v339
    %v358 = vpack.c.bf16 %v342, %v341
    %v359 = vld [vmem:[%s3] sm:$0xf]
    %v360 = vld [vmem:[%s3 + $0x4] sm:$0xf]
    %v361 = vld [vmem:[%s3 + $0x8] sm:$0xf]
    %v362 = vld [vmem:[%s3 + $0xc] sm:$0xf]
    %v363 = vld [vmem:[%s3 + $0x10] sm:$0xf]
    %v364 = vld [vmem:[%s3 + $0x14] sm:$0xf]
    %v365 = vld [vmem:[%s3 + $0x18] sm:$0xf]
    %v366 = vld [vmem:[%s3 + $0x1c] sm:$0xf]
    %v367 = vld [vmem:[%s3 + $0x20] sm:$0xf]
    %v368 = vld [vmem:[%s3 + $0x24] sm:$0xf]
    %v369 = vld [vmem:[%s3 + $0x28] sm:$0xf]
    %v370 = vld [vmem:[%s3 + $0x2c] sm:$0xf]
    %v371 = vld [vmem:[%s3 + $0x30] sm:$0xf]
    %v372 = vld [vmem:[%s3 + $0x34] sm:$0xf]
    %v373 = vld [vmem:[%s3 + $0x38] sm:$0xf]
    %v374 = vld [vmem:[%s3 + $0x3c] sm:$0xf]
    %v375 = vld [vmem:[%s4] sm:$0x1]
    %v377 = vlaneseq
    %v378 = vshrl.u32 %v377, 7
    %v379 = vsub.s32 0, %v378
    %v380 = vrot.slane %v375, %v379
    %v398 = vunpack.c.l.b16 %v359
    %v399 = vunpack.c.l.b16 %v360
    %v400 = vunpack.c.l.b16 %v361
    %v401 = vunpack.c.l.b16 %v362
    %v402 = vunpack.c.l.b16 %v363
    %v403 = vunpack.c.l.b16 %v364
    %v404 = vunpack.c.l.b16 %v365
    %v405 = vunpack.c.l.b16 %v366
    %v406 = vunpack.c.l.b16 %v367
    %v407 = vunpack.c.l.b16 %v368
    %v408 = vunpack.c.l.b16 %v369
    %v409 = vunpack.c.l.b16 %v370
    %v410 = vunpack.c.l.b16 %v371
    %v411 = vunpack.c.l.b16 %v372
    %v412 = vunpack.c.l.b16 %v373
    %v413 = vunpack.c.l.b16 %v374
    %v414 = vpack.c.b16 %v399, %v398
    %v415 = vpack.c.b16 %v401, %v400
    %v416 = vpack.c.b16 %v403, %v402
    %v417 = vpack.c.b16 %v405, %v404
    %v418 = vpack.c.b16 %v407, %v406
    %v419 = vpack.c.b16 %v409, %v408
    %v420 = vpack.c.b16 %v411, %v410
    %v421 = vpack.c.b16 %v413, %v412
    %430 = vmatprep.subr.bf16.mxu0 0
    %431 = vmatpush1.bf16.msra.mxu0 %v421
    %432 = vmatprep.subr.bf16.mxu0 0
    %433 = vmatpush1.bf16.msra.mxu0 %v420
    %434 = vmatprep.subr.bf16.mxu0 0
    %435 = vmatpush1.bf16.msra.mxu0 %v419
    %436 = vmatprep.subr.bf16.mxu0 0
    %437 = vmatpush1.bf16.msra.mxu0 %v418
    %438 = vmatprep.subr.bf16.mxu0 0
    %439 = vmatpush1.bf16.msra.mxu0 %v417
    %440 = vmatprep.subr.bf16.mxu0 0
    %441 = vmatpush1.bf16.msra.mxu0 %v416
    %442 = vmatprep.subr.bf16.mxu0 0
    %443 = vmatpush1.bf16.msra.mxu0 %v415
    %444 = vmatprep.subr.bf16.mxu0 0
    %445 = vmatpush1.bf16.msra.mxu0 %v414
    %446 = vmatprep.subr.bf16.mxu0 0
    %447 = vmatpush2.bf16.msra.mxu0 0
    %448 = vmatprep.subr.bf16.mxu0 0
    %449 = vmatpush2.bf16.msra.mxu0 0
    %450 = vmatprep.subr.bf16.mxu0 0
    %451 = vmatpush2.bf16.msra.mxu0 0
    %452 = vmatprep.subr.bf16.mxu0 0
    %453 = vmatpush2.bf16.msra.mxu0 0
    %454 = vmatprep.subr.bf16.mxu0 0
    %455 = vmatpush2.bf16.msra.mxu0 0
    %456 = vmatprep.subr.bf16.mxu0 0
    %457 = vmatpush2.bf16.msra.mxu0 0
    %458 = vmatprep.subr.bf16.mxu0 0
    %459 = vmatpush2.bf16.msra.mxu0 0
    %460 = vmatprep.subr.bf16.mxu0 0
    %461 = vmatpush2.bf16.msra.mxu0 0
    %462 = vmatprep.mubr.bf16.mxu0 0
    %463 = vmatmul.mubr.bf16.gmra.mxu0 %v343
    %v464 = vpop.f32.mrf.mxu0
    %v465 = vadd.f32 %v380, %v464
    %v466 = vpop.f32.mrf.mxu0
    %v467 = vpop.f32.mrf.mxu0
    %v468 = vadd.f32 %v380, %v467
    %v469 = vpop.f32.mrf.mxu0
    %470 = vmatprep.mubr.bf16.mxu0 0
    %471 = vmatmul.mubr.bf16.gmra.mxu0 %v344
    %v472 = vpop.f32.mrf.mxu0
    %v473 = vadd.f32 %v380, %v472
    %v474 = vpop.f32.mrf.mxu0
    %v475 = vpop.f32.mrf.mxu0
    %v476 = vadd.f32 %v380, %v475
    %v477 = vpop.f32.mrf.mxu0
    %478 = vmatprep.mubr.bf16.mxu0 0
    %479 = vmatmul.mubr.bf16.gmra.mxu0 %v345
    %v480 = vpop.f32.mrf.mxu0
    %v481 = vadd.f32 %v380, %v480
    %v482 = vpop.f32.mrf.mxu0
    %v483 = vpop.f32.mrf.mxu0
    %v484 = vadd.f32 %v380, %v483
    %v485 = vpop.f32.mrf.mxu0
    %486 = vmatprep.mubr.bf16.mxu0 0
    %487 = vmatmul.mubr.bf16.gmra.mxu0 %v346
    %v488 = vpop.f32.mrf.mxu0
    %v489 = vadd.f32 %v380, %v488
    %v490 = vpop.f32.mrf.mxu0
    %v491 = vpop.f32.mrf.mxu0
    %v492 = vadd.f32 %v380, %v491
    %v493 = vpop.f32.mrf.mxu0
    %494 = vmatprep.mubr.bf16.mxu0 0
    %495 = vmatmul.mubr.bf16.gmra.mxu0 %v347
    %v496 = vpop.f32.mrf.mxu0
    %v497 = vadd.f32 %v380, %v496
    %v498 = vpop.f32.mrf.mxu0
    %v499 = vpop.f32.mrf.mxu0
    %v500 = vadd.f32 %v380, %v499
    %v501 = vpop.f32.mrf.mxu0
    %502 = vmatprep.mubr.bf16.mxu0 0
    %503 = vmatmul.mubr.bf16.gmra.mxu0 %v348
    %v504 = vpop.f32.mrf.mxu0
    %v505 = vadd.f32 %v380, %v504
    %v506 = vpop.f32.mrf.mxu0
    %v507 = vpop.f32.mrf.mxu0
    %v508 = vadd.f32 %v380, %v507
    %v509 = vpop.f32.mrf.mxu0
    %510 = vmatprep.mubr.bf16.mxu0 0
    %511 = vmatmul.mubr.bf16.gmra.mxu0 %v349
    %v512 = vpop.f32.mrf.mxu0
    %v513 = vadd.f32 %v380, %v512
    %v514 = vpop.f32.mrf.mxu0
    %v515 = vpop.f32.mrf.mxu0
    %v516 = vadd.f32 %v380, %v515
    %v517 = vpop.f32.mrf.mxu0
    %518 = vmatprep.mubr.bf16.mxu0 0
    %519 = vmatmul.mubr.bf16.gmra.mxu0 %v350
    %v520 = vpop.f32.mrf.mxu0
    %v521 = vadd.f32 %v380, %v520
    %v522 = vpop.f32.mrf.mxu0
    %v523 = vpop.f32.mrf.mxu0
    %v524 = vadd.f32 %v380, %v523
    %v525 = vpop.f32.mrf.mxu0
    %526 = vmatprep.mubr.bf16.mxu0 0
    %527 = vmatmul.mubr.bf16.gmra.mxu0 %v351
    %v528 = vpop.f32.mrf.mxu0
    %v529 = vadd.f32 %v380, %v528
    %v530 = vpop.f32.mrf.mxu0
    %v531 = vpop.f32.mrf.mxu0
    %v532 = vadd.f32 %v380, %v531
    %v533 = vpop.f32.mrf.mxu0
    %534 = vmatprep.mubr.bf16.mxu0 0
    %535 = vmatmul.mubr.bf16.gmra.mxu0 %v352
    %v536 = vpop.f32.mrf.mxu0
    %v537 = vadd.f32 %v380, %v536
    %v538 = vpop.f32.mrf.mxu0
    %v539 = vpop.f32.mrf.mxu0
    %v540 = vadd.f32 %v380, %v539
    %v541 = vpop.f32.mrf.mxu0
    %542 = vmatprep.mubr.bf16.mxu0 0
    %543 = vmatmul.mubr.bf16.gmra.mxu0 %v353
    %v544 = vpop.f32.mrf.mxu0
    %v545 = vadd.f32 %v380, %v544
    %v546 = vpop.f32.mrf.mxu0
    %v547 = vpop.f32.mrf.mxu0
    %v548 = vadd.f32 %v380, %v547
    %v549 = vpop.f32.mrf.mxu0
    %550 = vmatprep.mubr.bf16.mxu0 0
    %551 = vmatmul.mubr.bf16.gmra.mxu0 %v354
    %v552 = vpop.f32.mrf.mxu0
    %v553 = vadd.f32 %v380, %v552
    %v554 = vpop.f32.mrf.mxu0
    %v555 = vpop.f32.mrf.mxu0
    %v556 = vadd.f32 %v380, %v555
    %v557 = vpop.f32.mrf.mxu0
    %558 = vmatprep.mubr.bf16.mxu0 0
    %559 = vmatmul.mubr.bf16.gmra.mxu0 %v355
    %v560 = vpop.f32.mrf.mxu0
    %v561 = vadd.f32 %v380, %v560
    %v562 = vpop.f32.mrf.mxu0
    %v563 = vpop.f32.mrf.mxu0
    %v564 = vadd.f32 %v380, %v563
    %v565 = vpop.f32.mrf.mxu0
    %566 = vmatprep.mubr.bf16.mxu0 0
    %567 = vmatmul.mubr.bf16.gmra.mxu0 %v356
    %v568 = vpop.f32.mrf.mxu0
    %v569 = vadd.f32 %v380, %v568
    %v570 = vpop.f32.mrf.mxu0
    %v571 = vpop.f32.mrf.mxu0
    %v572 = vadd.f32 %v380, %v571
    %v573 = vpop.f32.mrf.mxu0
    %574 = vmatprep.mubr.bf16.mxu0 0
    %575 = vmatmul.mubr.bf16.gmra.mxu0 %v357
    %v576 = vpop.f32.mrf.mxu0
    %v577 = vadd.f32 %v380, %v576
    %v578 = vpop.f32.mrf.mxu0
    %v579 = vpop.f32.mrf.mxu0
    %v580 = vadd.f32 %v380, %v579
    %v581 = vpop.f32.mrf.mxu0
    %582 = vmatprep.mubr.bf16.mxu0 0
    %583 = vmatmul.mubr.bf16.gmra.mxu0 %v358
    %v584 = vpop.f32.mrf.mxu0
    %v585 = vadd.f32 %v380, %v584
    %v586 = vpop.f32.mrf.mxu0
    %v587 = vpop.f32.mrf.mxu0
    %v588 = vadd.f32 %v380, %v587
    %v589 = vpop.f32.mrf.mxu0
    %590 = vdwg.mxu0
    %v591 = vmax.f32 %v465, 0.0
    %v592 = vmax.f32 %v468, 0.0
    %v593 = vmax.f32 %v473, 0.0
    %v594 = vmax.f32 %v476, 0.0
    %v595 = vmax.f32 %v481, 0.0
    %v596 = vmax.f32 %v484, 0.0
    %v597 = vmax.f32 %v489, 0.0
    %v598 = vmax.f32 %v492, 0.0
    %v599 = vmax.f32 %v497, 0.0
    %v600 = vmax.f32 %v500, 0.0
    %v601 = vmax.f32 %v505, 0.0
    %v602 = vmax.f32 %v508, 0.0
    %v603 = vmax.f32 %v513, 0.0
    %v604 = vmax.f32 %v516, 0.0
    %v605 = vmax.f32 %v521, 0.0
    %v606 = vmax.f32 %v524, 0.0
    %v607 = vmax.f32 %v529, 0.0
    %v608 = vmax.f32 %v532, 0.0
    %v609 = vmax.f32 %v537, 0.0
    %v610 = vmax.f32 %v540, 0.0
    %v611 = vmax.f32 %v545, 0.0
    %v612 = vmax.f32 %v548, 0.0
    %v613 = vmax.f32 %v553, 0.0
    %v614 = vmax.f32 %v556, 0.0
    %v615 = vmax.f32 %v561, 0.0
    %v616 = vmax.f32 %v564, 0.0
    %v617 = vmax.f32 %v569, 0.0
    %v618 = vmax.f32 %v572, 0.0
    %v619 = vmax.f32 %v577, 0.0
    %v620 = vmax.f32 %v580, 0.0
    %v621 = vmax.f32 %v585, 0.0
    %v622 = vmax.f32 %v588, 0.0
    %623 = vxpose.xlu0.b32.start [1/16] %v591, 128
    %624 = vxpose.xlu0.b32.cont [2/16] %v592, 128
    %625 = vxpose.xlu0.b32.cont [3/16] %v593, 128
    %626 = vxpose.xlu0.b32.cont [4/16] %v594, 128
    %627 = vxpose.xlu0.b32.cont [5/16] %v595, 128
    %628 = vxpose.xlu0.b32.cont [6/16] %v596, 128
    %629 = vxpose.xlu0.b32.cont [7/16] %v597, 128
    %630 = vxpose.xlu0.b32.cont [8/16] %v598, 128
    %631 = vxpose.xlu0.b32.cont [9/16] %v599, 128
    %632 = vxpose.xlu0.b32.cont [10/16] %v600, 128
    %633 = vxpose.xlu0.b32.cont [11/16] %v601, 128
    %634 = vxpose.xlu0.b32.cont [12/16] %v602, 128
    %635 = vxpose.xlu0.b32.cont [13/16] %v603, 128
    %636 = vxpose.xlu0.b32.cont [14/16] %v604, 128
    %637 = vxpose.xlu0.b32.cont [15/16] %v605, 128
    %638 = vxpose.xlu0.b32.end [16/16] %v606, 128
    %v639 = vpop.trf.xlu0
    %v640 = vpop.trf.xlu0
    %v641 = vpop.trf.xlu0
    %v642 = vpop.trf.xlu0
    %v643 = vpop.trf.xlu0
    %v644 = vpop.trf.xlu0
    %v645 = vpop.trf.xlu0
    %v646 = vpop.trf.xlu0
    %v647 = vpop.trf.xlu0
    %v648 = vpop.trf.xlu0
    %v649 = vpop.trf.xlu0
    %v650 = vpop.trf.xlu0
    %v651 = vpop.trf.xlu0
    %v652 = vpop.trf.xlu0
    %v653 = vpop.trf.xlu0
    %v654 = vpop.trf.xlu0
    %655 = vxpose.xlu0.b32.start [1/16] %v607, 128
    %656 = vxpose.xlu0.b32.cont [2/16] %v608, 128
    %657 = vxpose.xlu0.b32.cont [3/16] %v609, 128
    %658 = vxpose.xlu0.b32.cont [4/16] %v610, 128
    %659 = vxpose.xlu0.b32.cont [5/16] %v611, 128
    %660 = vxpose.xlu0.b32.cont [6/16] %v612, 128
    %661 = vxpose.xlu0.b32.cont [7/16] %v613, 128
    %662 = vxpose.xlu0.b32.cont [8/16] %v614, 128
    %663 = vxpose.xlu0.b32.cont [9/16] %v615, 128
    %664 = vxpose.xlu0.b32.cont [10/16] %v616, 128
    %665 = vxpose.xlu0.b32.cont [11/16] %v617, 128
    %666 = vxpose.xlu0.b32.cont [12/16] %v618, 128
    %667 = vxpose.xlu0.b32.cont [13/16] %v619, 128
    %668 = vxpose.xlu0.b32.cont [14/16] %v620, 128
    %669 = vxpose.xlu0.b32.cont [15/16] %v621, 128
    %670 = vxpose.xlu0.b32.end [16/16] %v622, 128
    %v671 = vpop.trf.xlu0
    %v672 = vpop.trf.xlu0
    %v673 = vpop.trf.xlu0
    %v674 = vpop.trf.xlu0
    %v675 = vpop.trf.xlu0
    %v676 = vpop.trf.xlu0
    %v677 = vpop.trf.xlu0
    %v678 = vpop.trf.xlu0
    %v679 = vpop.trf.xlu0
    %v680 = vpop.trf.xlu0
    %v681 = vpop.trf.xlu0
    %v682 = vpop.trf.xlu0
    %v683 = vpop.trf.xlu0
    %v684 = vpop.trf.xlu0
    %v685 = vpop.trf.xlu0
    %v686 = vpop.trf.xlu0
    %v687 = vpack.c.bf16 %v640, %v639
    %v688 = vpack.c.bf16 %v672, %v671
    %v689 = vpack.c.bf16 %v642, %v641
    %v690 = vpack.c.bf16 %v674, %v673
    %v691 = vpack.c.bf16 %v644, %v643
    %v692 = vpack.c.bf16 %v676, %v675
    %v693 = vpack.c.bf16 %v646, %v645
    %v694 = vpack.c.bf16 %v678, %v677
    %v695 = vpack.c.bf16 %v648, %v647
    %v696 = vpack.c.bf16 %v680, %v679
    %v697 = vpack.c.bf16 %v650, %v649
    %v698 = vpack.c.bf16 %v682, %v681
    %v699 = vpack.c.bf16 %v652, %v651
    %v700 = vpack.c.bf16 %v684, %v683
    %v701 = vpack.c.bf16 %v654, %v653
    %v702 = vpack.c.bf16 %v686, %v685
    %v703 = vld [vmem:[%s5] sm:$0xf]
    %704 = vmatprep.subr.bf16.mxu0 %v702
    %705 = vmatpush1.bf16.msra.mxu0 %v701
    %706 = vmatprep.subr.bf16.mxu0 %v700
    %707 = vmatpush1.bf16.msra.mxu0 %v699
    %708 = vmatprep.subr.bf16.mxu0 %v698
    %709 = vmatpush1.bf16.msra.mxu0 %v697
    %710 = vmatprep.subr.bf16.mxu0 %v696
    %711 = vmatpush1.bf16.msra.mxu0 %v695
    %712 = vmatprep.subr.bf16.mxu0 %v694
    %713 = vmatpush1.bf16.msra.mxu0 %v693
    %714 = vmatprep.subr.bf16.mxu0 %v692
    %715 = vmatpush1.bf16.msra.mxu0 %v691
    %716 = vmatprep.subr.bf16.mxu0 %v690
    %717 = vmatpush1.bf16.msra.mxu0 %v689
    %718 = vmatprep.subr.bf16.mxu0 %v688
    %719 = vmatpush1.bf16.msra.mxu0 %v687
    %720 = vmatprep.subr.bf16.mxu0 0
    %721 = vmatpush2.bf16.msra.mxu0 0
    %722 = vmatprep.subr.bf16.mxu0 0
    %723 = vmatpush2.bf16.msra.mxu0 0
    %724 = vmatprep.subr.bf16.mxu0 0
    %725 = vmatpush2.bf16.msra.mxu0 0
    %726 = vmatprep.subr.bf16.mxu0 0
    %727 = vmatpush2.bf16.msra.mxu0 0
    %728 = vmatprep.subr.bf16.mxu0 0
    %729 = vmatpush2.bf16.msra.mxu0 0
    %730 = vmatprep.subr.bf16.mxu0 0
    %731 = vmatpush2.bf16.msra.mxu0 0
    %732 = vmatprep.subr.bf16.mxu0 0
    %733 = vmatpush2.bf16.msra.mxu0 0
    %734 = vmatprep.subr.bf16.mxu0 0
    %735 = vmatpush2.bf16.msra.mxu0 0
    %736 = vmatprep.mubr.bf16.mxu0 0
    %737 = vmatmul.mubr.bf16.gmra.mxu0 %v703
    %v738 = vpop.f32.mrf.mxu0
    %v739 = vadd.f32 0.0, %v738
    %v740 = vpop.f32.mrf.mxu0
    %v741 = vadd.f32 0.0, %v740
    %v742 = vpop.f32.mrf.mxu0
    %v743 = vpop.f32.mrf.mxu0
    %744 = vdwg.mxu0
    %v745 = vrot.slane %v739, 4
    %v746 = vadd.f32 %v739, %v745
    %v747 = vrot.slane %v746, 2
    %v748 = vadd.f32 %v746, %v747
    %v749 = vrot.slane %v748, 1
    %v750 = vadd.f32 %v748, %v749
    %v751 = vrot.slane %v741, 4
    %v752 = vadd.f32 %v741, %v751
    %v753 = vrot.slane %v752, 2
    %v754 = vadd.f32 %v752, %v753
    %v755 = vrot.slane %v754, 1
    %v756 = vadd.f32 %v754, %v755
    %v757 = vld [vmem:[#allocation2] sm:$0x1]
    %759 = vset.pattern.permute.xlu0 0
    %760 = vperm.xlu0 %759, %v757
    %v761 = vpop.permute.xlu0 %760
    %v763 = vlaneseq
    %v764 = vshrl.u32 %v763, 7
    %v765 = vsub.s32 0, %v764
    %v766 = vrot.slane %v761, %v765
    %v767 = vadd.f32 %v750, %v766
    %v768 = vadd.f32 %v756, %v766
    %v771 = vcombine.low %v767, %v768
    %v773 = vunpack.c.l.s4 1966171168
    %v774 = vunpack.c.0.s8 %v773
    %v775 = vlaneseq
    %v776 = vshrl.u32 %v775, 7
    %v777 = vsub.s32 %v774, %v776
    %v778 = vrot.slane %v771, %v777
    %v780 = vunpack.c.l.s4 1966171168
    %v781 = vunpack.c.0.s8 %v780
    %v782 = vlaneseq
    %v783 = vshrl.u32 %v782, 7
    %v784 = vsub.s32 %v781, %v783
    %v785 = vrot.slane %v778, %v784
    %v787 = vlaneseq
    %vm788 = vcmp.ge.s32.totalorder %v787, 0
    %vm789 = vcmp.lt.s32.totalorder %v787, 256
    %vm790 = vmand %vm788, %vm789
    %791 = vst.msk [vmem:[#allocation3] sm:$0x3] %vm790, %v785
    // Predicated region
    $region30: #{critic_forward.1} parent=1 // pred_check
      _
    $region31: #{critic_forward.1} parent=1 // pred_check_branch
      %793 = sbr.rel (0) target = $region33
    $region32: #{critic_forward.1} parent=1 // pred_region
      %s795 = ssub.s32 32, 32
      %796 = vsyncadd [#allocation4], %s795
      %s798 = sshll.u32 [#allocation3], 4
      %s799 = int_to_ptr.vmem [resolvable:$true] %s798
      %801 = dma.vmem_to_hbm [thread:$0]  %s799, 32, %s7, [#allocation4]
    $region33: #{critic_forward.1} parent=1 // pred_fallthru
      _
    // Predicated region
    $region34: #{critic_forward.1} parent=1 // pred_check
      _
    $region35: #{critic_forward.1} parent=1 // pred_check_branch
      %803 = sbr.rel (0) target = $region37
    $region36: #{critic_forward.1} parent=1 // pred_region
      %804 = dma.done [#allocation4], 32
    $region37: #{critic_forward.1} parent=1 // pred_fallthru
      _
    %805 = vsyncpa [#allocation4], 1

</llo_original>
